<compile_context>
chip_gen: v5e
topology: v5e:2x2
jax: 0.10.0
libtpu: 0.0.40
codegen_flags: <defaults>
</compile_context>

<pallas_src>
import jax
import jax.numpy as jnp
from jax.experimental import pallas as pl
from jax.experimental.pallas import tpu as pltpu

EPS = 1e-10


def _make_l2norm_kernel(P, C):
    """Kernel for one (1, P*C, t_hw) block holding P packed batch elements."""

    def kernel(x_ref, w_ref, o_ref):
        x = x_ref[...][0].astype(jnp.float32)        # (P*C, t_hw)
        w = w_ref[...].astype(jnp.float32)           # (C, 1), broadcast over lanes
        parts = []
        for g in range(P):                           # static unroll, P <= 8
            xg = x[g * C:(g + 1) * C, :]             # static sublane slice (C, t_hw)
            ss = jnp.sum(xg * xg, axis=0, keepdims=True)           # (1, t_hw)
            # Row reciprocal: one EUP op per lane-row instead of per element.
            # approx=False keeps the result within the 1e-5 rtol tolerance.
            inv = pl.reciprocal(jnp.sqrt(ss) + EPS, approx=False)  # (1, t_hw)
            parts.append((xg * inv) * w)             # two VPU muls
        y = parts[0] if P == 1 else jnp.concatenate(parts, axis=0)
        o_ref[...] = y[None, :, :].astype(o_ref.dtype)

    return kernel


def _round_up(a, b):
    return (a + b - 1) // b * b


def l2norm_pallas(x_nchw, weight):
    """x_nchw: (N, C, H, W) float32; weight: (C,) float32 -> (N, C, H, W)."""
    N, C, H, W = x_nchw.shape
    HW = H * W
    x = x_nchw.reshape(N, C, HW)

    # Sublane packing: fill the 8 sublanes when C is small (e.g. C=4 -> P=2).
    P = 1
    if C < 8:
        P = max(1, 8 // C)
        while P > 1 and N % P != 0:
            P -= 1
    NB = N // P

    # Lane-dense HW tiling: tile width is a multiple of 128, capped at 512.
    t_hw = min(_round_up(HW, 128), 512)
    HWp = _round_up(HW, t_hw)
    if HWp != HW:
        # Zero padding is harmless: padded columns give 0 * (1/eps) = 0.
        x = jnp.pad(x, ((0, 0), (0, 0), (0, HWp - HW)))

    xp = x.reshape(NB, P * C, HWp)
    w = weight.reshape(C, 1).astype(x.dtype)

    grid = (NB, HWp // t_hw)
    out = pl.pallas_call(
        _make_l2norm_kernel(P, C),
        out_shape=jax.ShapeDtypeStruct((NB, P * C, HWp), x.dtype),
        grid_spec=pltpu.PrefetchScalarGridSpec(
            num_scalar_prefetch=0,
            grid=grid,
            in_specs=[
                pl.BlockSpec((1, P * C, t_hw), lambda n, h: (n, 0, h)),
                pl.BlockSpec((C, 1), lambda n, h: (0, 0)),
            ],
            out_specs=pl.BlockSpec((1, P * C, t_hw), lambda n, h: (n, 0, h)),
        ),
        compiler_params=pltpu.CompilerParams(
            dimension_semantics=("parallel", "parallel"),
        ),
    )(xp, w)

    out = out.reshape(N, C, HWp)
    if HWp != HW:
        out = out[:, :, :HW]
    return out.reshape(N, C, H, W)


if __name__ == "__main__":
    # Module construction: L2Norm(n_channels=C, scale=gamma)
    N, C, H, W = 2, 4, 16, 16
    gamma = 20.0

    # Parameter init: init.constant_(self.weight, self.gamma)
    weight = jnp.full((C,), gamma, dtype=jnp.float32)

    key = jax.random.PRNGKey(0)
    x = jax.random.normal(key, (N, C, H, W), dtype=jnp.float32)

    out = l2norm_pallas(x, weight)
    out = jax.block_until_ready(out)

    # Reference check (pure JAX, mirrors the PyTorch forward exactly)
    norm = jnp.sqrt(jnp.sum(x * x, axis=1, keepdims=True)) + EPS
    ref = weight[None, :, None, None] * (x / norm)
    assert out.shape == (N, C, H, W)
    assert jnp.allclose(out, ref, atol=1e-5, rtol=1e-5)

    print("KERNEL_OK")
</pallas_src>

<mosaic_0001>
module attributes {stable_mosaic.version = 11 : i64} {
  func.func @kernel(%arg0: i32, %arg1: i32, %arg2: memref<1x8x256xf32, #tpu.memory_space<vmem>>, %arg3: memref<4x1xf32, #tpu.memory_space<vmem>>, %arg4: memref<1x8x256xf32, #tpu.memory_space<vmem>>) attributes {dimension_semantics = [#tpu.dimension_semantics<parallel>, #tpu.dimension_semantics<parallel>], iteration_bounds = array<i64: 1, 1>, scalar_prefetch = 0 : i64, scratch_operands = 0 : i64, tpu.core_type = #tpu.core_type<tc>, window_params = [{transform_indices = @transform_0, window_bounds = array<i64: 1, 8, 256>}, {pipeline_mode = #tpu.pipeline_mode<synchronous>, transform_indices = @transform_1, window_bounds = array<i64: 4, 1>}, {transform_indices = @transform_2, window_bounds = array<i64: 1, 8, 256>}]} {
    %c0 = arith.constant 0 : index
    %c0_0 = arith.constant 0 : index
    %c0_1 = arith.constant 0 : index
    %0 = vector.load %arg2[%c0, %c0_0, %c0_1] : memref<1x8x256xf32, #tpu.memory_space<vmem>>, vector<1x8x256xf32>
    %1 = vector.shape_cast %0 : vector<1x8x256xf32> to vector<8x256xf32>
    %c0_2 = arith.constant 0 : index
    %c0_3 = arith.constant 0 : index
    %2 = vector.load %arg3[%c0_2, %c0_3] : memref<4x1xf32, #tpu.memory_space<vmem>>, vector<4x1xf32>
    %3 = vector.extract_strided_slice %1 {offsets = [0, 0], sizes = [4, 256], strides = [1, 1]} : vector<8x256xf32> to vector<4x256xf32>
    %4 = arith.mulf %3, %3 : vector<4x256xf32>
    %cst = arith.constant dense<0.000000e+00> : vector<256xf32>
    %5 = vector.multi_reduction <add>, %4, %cst [0] : vector<4x256xf32> to vector<256xf32>
    %6 = vector.shape_cast %5 : vector<256xf32> to vector<1x256xf32>
    %7 = math.sqrt %6 : vector<1x256xf32>
    %cst_4 = arith.constant 1.000000e-10 : f32
    %8 = vector.broadcast %cst_4 : f32 to vector<1x256xf32>
    %9 = arith.addf %7, %8 : vector<1x256xf32>
    %10 = tpu.reciprocal %9 : vector<1x256xf32> -> vector<1x256xf32>
    %11 = vector.broadcast %10 : vector<1x256xf32> to vector<4x256xf32>
    %12 = arith.mulf %3, %11 : vector<4x256xf32>
    %13 = vector.broadcast %2 : vector<4x1xf32> to vector<4x256xf32>
    %14 = arith.mulf %12, %13 : vector<4x256xf32>
    %15 = vector.extract_strided_slice %1 {offsets = [4, 0], sizes = [4, 256], strides = [1, 1]} : vector<8x256xf32> to vector<4x256xf32>
    %16 = arith.mulf %15, %15 : vector<4x256xf32>
    %cst_5 = arith.constant dense<0.000000e+00> : vector<256xf32>
    %17 = vector.multi_reduction <add>, %16, %cst_5 [0] : vector<4x256xf32> to vector<256xf32>
    %18 = vector.shape_cast %17 : vector<256xf32> to vector<1x256xf32>
    %19 = math.sqrt %18 : vector<1x256xf32>
    %cst_6 = arith.constant 1.000000e-10 : f32
    %20 = vector.broadcast %cst_6 : f32 to vector<1x256xf32>
    %21 = arith.addf %19, %20 : vector<1x256xf32>
    %22 = tpu.reciprocal %21 : vector<1x256xf32> -> vector<1x256xf32>
    %23 = vector.broadcast %22 : vector<1x256xf32> to vector<4x256xf32>
    %24 = arith.mulf %15, %23 : vector<4x256xf32>
    %25 = vector.broadcast %2 : vector<4x1xf32> to vector<4x256xf32>
    %26 = arith.mulf %24, %25 : vector<4x256xf32>
    %27 = tpu.concatenate %14, %26 in 0 : vector<4x256xf32>, vector<4x256xf32> -> vector<8x256xf32>
    %28 = vector.shape_cast %27 : vector<8x256xf32> to vector<1x8x256xf32>
    %c0_7 = arith.constant 0 : index
    %c0_8 = arith.constant 0 : index
    %c0_9 = arith.constant 0 : index
    %29 = vector.load %arg4[%c0_7, %c0_8, %c0_9] : memref<1x8x256xf32, #tpu.memory_space<vmem>>, vector<1x8x256xf32>
    tpu.vector_store %arg4[%c0_7, %c0_8, %c0_9], %28 {strides = array<i32>} : memref<1x8x256xf32, #tpu.memory_space<vmem>>, vector<1x8x256xf32>,
    return
  }
  func.func @transform_0(%arg0: i32, %arg1: i32) -> (i32, i32, i32) {
    %c0_i32 = arith.constant 0 : i32
    %c0_i32_0 = arith.constant 0 : i32
    return %arg0, %c0_i32, %arg1 : i32, i32, i32
  }
  func.func @transform_1(%arg0: i32, %arg1: i32) -> (i32, i32) {
    %c0_i32 = arith.constant 0 : i32
    %c0_i32_0 = arith.constant 0 : i32
    %c0_i32_1 = arith.constant 0 : i32
    return %c0_i32, %c0_i32_0 : i32, i32
  }
  func.func @transform_2(%arg0: i32, %arg1: i32) -> (i32, i32, i32) {
    %c0_i32 = arith.constant 0 : i32
    %c0_i32_0 = arith.constant 0 : i32
    return %arg0, %c0_i32, %arg1 : i32, i32, i32
  }
}

</mosaic_0001>

<llo_original>
// kernel: tpu_custom_call.1
$region0: #{tpu_custom_call.1}
  #allocation0 [shape = 'u32[]', space=smem, size = 0x4, offset = 0x4, fixed_abs, tag = 'smem constant byte address 0x4 - core index']
  #allocation1 [shape = 'u32[72,128]{1,0:T(1,128)}', space=vmem, size = 0x9000, scoped, tag = 'internal scratch']
  %s0 = inlined_call_operand.hbm [shape: f32[1,8,256], index: 0, kind: input, shape index: {}]
  %s1 = inlined_call_operand.vmem [shape: f32[4,1], index: 1, kind: input, shape index: {}]
  %s2 = inlined_call_operand.hbm [shape: f32[1,8,256], index: 2, kind: output, shape index: {}]
  %s3 = sld [smem:[#allocation0]]
  $region22: #{tpu_custom_call.1} parent=0
    _
  %s5 = ssub.s32 1, %s3
  %s6 = scalar_select 0, %s5, %s3
  $region1: #{tpu_custom_call.1} parent=0
    #allocation2 [shape = 'u8[8192]{0}', space=vmem, size = 0x2000, scoped, tag = 'input window, operand 0, single buffered']
    #allocation3 [shape = 's32[1]{0}', space=sflag, size = 0x4, scoped, tag = 'scoped memory for tpu_custom_call.1']
    #allocation4 [shape = 's32[1]{0}', space=sflag, size = 0x4, scoped, tag = 'scoped memory for tpu_custom_call.1']
    #allocation5 [shape = 'u8[8192]{0}', space=vmem, size = 0x2000, scoped, tag = 'output window, operand 0, single buffered']
    %7 = vsyncpa [#allocation3], 0
    %8 = vsyncpa [#allocation4], 0
    // Predicated region
    $region2: #{tpu_custom_call.1} parent=1 // pred_check
      _
    $region3: #{tpu_custom_call.1} parent=1 // pred_check_branch
      %10 = sbr.rel (0) target = $region5
    $region4: #{tpu_custom_call.1} parent=1 // pred_region
      %12 = vsyncadd [#allocation3], 0
      %s14 = sshll.u32 %s0, 4
      %s15 = int_to_ptr.hbm [resolvable:$true] %s14
      %s16 = sshll.u32 [#allocation2], 4
      %s17 = int_to_ptr.vmem [resolvable:$true] %s16
      %19 = dma.hbm_to_vmem [thread:$0]  %s15, 256, %s17, [#allocation3]
    $region5: #{tpu_custom_call.1} parent=1 // pred_fallthru
      _
    // Predicated region
    $region6: #{tpu_custom_call.1} parent=1 // pred_check
      _
    $region7: #{tpu_custom_call.1} parent=1 // pred_check_branch
      %21 = sbr.rel (0) target = $region9
    $region8: #{tpu_custom_call.1} parent=1 // pred_region
      _
    $region9: #{tpu_custom_call.1} parent=1 // pred_fallthru
      _
    // Predicated region
    $region10: #{tpu_custom_call.1} parent=1 // pred_check
      _
    $region11: #{tpu_custom_call.1} parent=1 // pred_check_branch
      %23 = sbr.rel (0) target = $region13
    $region12: #{tpu_custom_call.1} parent=1 // pred_region
      %25 = dma.done [#allocation3], 256
    $region13: #{tpu_custom_call.1} parent=1 // pred_fallthru
      _
    %v26 = vld [vmem:[#allocation2] sm:$0xff]
    %v27 = vld [vmem:[#allocation2 + $0x8] sm:$0xff]
    %v28 = vld [vmem:[%s1] sm:$0xf]
    %v29 = vmul.f32 %v26, %v26
    %v30 = vmul.f32 %v27, %v27
    %vm31 = vcmask 1043456
    %v32 = vsel %vm31, %v29, 0.0
    %v33 = vrot.slane %v32, 4
    %v34 = vadd.f32 %v32, %v33
    %v35 = vrot.slane %v34, 2
    %v36 = vadd.f32 %v34, %v35
    %v37 = vrot.slane %v36, 1
    %v38 = vadd.f32 %v36, %v37
    %v39 = vsel %vm31, %v30, 0.0
    %v40 = vrot.slane %v39, 4
    %v41 = vadd.f32 %v39, %v40
    %v42 = vrot.slane %v41, 2
    %v43 = vadd.f32 %v41, %v42
    %v44 = vrot.slane %v43, 1
    %v45 = vadd.f32 %v43, %v44
    %v46 = vrsqrt.pop %v38
    %v47 = vmul.f32 %v46, %v38
    %v48 = vmul.f32 %v47, %v46
    %v49 = vmul.f32 0.5, %v48
    %v50 = vsub.f32 1.5, %v49
    %v51 = vmul.f32 %v46, %v50
    %v52 = vmul.f32 %v38, %v51
    %vm53 = vcmp.eq.f32.partialorder %v38, inf
    %v54 = vsel %vm53, %v38, %v52
    %vm55 = vcmp.eq.f32.partialorder %v38, 0.0
    %v56 = vand.u32 %v38, 2147483648
    %v57 = vsel %vm55, %v56, %v54
    %v58 = vrsqrt.pop %v45
    %v59 = vmul.f32 %v58, %v45
    %v60 = vmul.f32 %v59, %v58
    %v61 = vmul.f32 0.5, %v60
    %v62 = vsub.f32 1.5, %v61
    %v63 = vmul.f32 %v58, %v62
    %v64 = vmul.f32 %v45, %v63
    %vm65 = vcmp.eq.f32.partialorder %v45, inf
    %v66 = vsel %vm65, %v45, %v64
    %vm67 = vcmp.eq.f32.partialorder %v45, 0.0
    %v68 = vand.u32 %v45, 2147483648
    %v69 = vsel %vm67, %v68, %v66
    %v70 = vadd.f32 %v57, 1e-10
    %v71 = vadd.f32 %v69, 1e-10
    %v72 = vrcp.pop %v70
    %v73 = vmul.f32 %v70, %v72
    %v74 = vsub.f32 1.0, %v73
    %v75 = vmul.f32 %v72, %v74
    %v76 = vadd.f32 %v72, %v75
    %vm77 = vweird.f32 %v70
    %vm78 = vweird.f32 %v72
    %vm79 = vmor %vm77, %vm78
    %v80 = vsel %vm79, %v72, %v76
    %v81 = vand.u32 2147483647, %v70
    %vm82 = vcmp.eq.f32.partialorder %v81, 8.507059e+37
    %v83 = vand.u32 %v70, 2147483648
    %v84 = vor.u32 1.1754944e-38, %v83
    %v85 = vsel %vm82, %v84, %v80
    %v86 = vrcp.pop %v71
    %v87 = vmul.f32 %v71, %v86
    %v88 = vsub.f32 1.0, %v87
    %v89 = vmul.f32 %v86, %v88
    %v90 = vadd.f32 %v86, %v89
    %vm91 = vweird.f32 %v71
    %vm92 = vweird.f32 %v86
    %vm93 = vmor %vm91, %vm92
    %v94 = vsel %vm93, %v86, %v90
    %v95 = vand.u32 2147483647, %v71
    %vm96 = vcmp.eq.f32.partialorder %v95, 8.507059e+37
    %v97 = vand.u32 %v71, 2147483648
    %v98 = vor.u32 1.1754944e-38, %v97
    %v99 = vsel %vm96, %v98, %v94
    %v100 = vmul.f32 %v26, %v85
    %v101 = vmul.f32 %v27, %v99
    %103 = vset.pattern.permute.xlu0 0
    %104 = vperm.xlu0 %103, %v28
    %v105 = vpop.permute.xlu0 %104
    %v107 = vmul.f32 %v100, %v105
    %v108 = vmul.f32 %v101, %v105
    %v111 = vrot.slane %v29, 4
    %v112 = vrot.slane %v30, 4
    %v115 = vsel %vm31, %v111, 0.0
    %v116 = vrot.slane %v115, 4
    %v117 = vadd.f32 %v115, %v116
    %v118 = vrot.slane %v117, 2
    %v119 = vadd.f32 %v117, %v118
    %v120 = vrot.slane %v119, 1
    %v121 = vadd.f32 %v119, %v120
    %v122 = vsel %vm31, %v112, 0.0
    %v123 = vrot.slane %v122, 4
    %v124 = vadd.f32 %v122, %v123
    %v125 = vrot.slane %v124, 2
    %v126 = vadd.f32 %v124, %v125
    %v127 = vrot.slane %v126, 1
    %v128 = vadd.f32 %v126, %v127
    %v129 = vrsqrt.pop %v121
    %v130 = vmul.f32 %v129, %v121
    %v131 = vmul.f32 %v130, %v129
    %v132 = vmul.f32 0.5, %v131
    %v133 = vsub.f32 1.5, %v132
    %v134 = vmul.f32 %v129, %v133
    %v135 = vmul.f32 %v121, %v134
    %vm136 = vcmp.eq.f32.partialorder %v121, inf
    %v137 = vsel %vm136, %v121, %v135
    %vm138 = vcmp.eq.f32.partialorder %v121, 0.0
    %v139 = vand.u32 %v121, 2147483648
    %v140 = vsel %vm138, %v139, %v137
    %v141 = vrsqrt.pop %v128
    %v142 = vmul.f32 %v141, %v128
    %v143 = vmul.f32 %v142, %v141
    %v144 = vmul.f32 0.5, %v143
    %v145 = vsub.f32 1.5, %v144
    %v146 = vmul.f32 %v141, %v145
    %v147 = vmul.f32 %v128, %v146
    %vm148 = vcmp.eq.f32.partialorder %v128, inf
    %v149 = vsel %vm148, %v128, %v147
    %vm150 = vcmp.eq.f32.partialorder %v128, 0.0
    %v151 = vand.u32 %v128, 2147483648
    %v152 = vsel %vm150, %v151, %v149
    %v153 = vadd.f32 %v140, 1e-10
    %v154 = vadd.f32 %v152, 1e-10
    %v155 = vrcp.pop %v153
    %v156 = vmul.f32 %v153, %v155
    %v157 = vsub.f32 1.0, %v156
    %v158 = vmul.f32 %v155, %v157
    %v159 = vadd.f32 %v155, %v158
    %vm160 = vweird.f32 %v153
    %vm161 = vweird.f32 %v155
    %vm162 = vmor %vm160, %vm161
    %v163 = vsel %vm162, %v155, %v159
    %v164 = vand.u32 2147483647, %v153
    %vm165 = vcmp.eq.f32.partialorder %v164, 8.507059e+37
    %v166 = vand.u32 %v153, 2147483648
    %v167 = vor.u32 1.1754944e-38, %v166
    %v168 = vsel %vm165, %v167, %v163
    %v169 = vrcp.pop %v154
    %v170 = vmul.f32 %v154, %v169
    %v171 = vsub.f32 1.0, %v170
    %v172 = vmul.f32 %v169, %v171
    %v173 = vadd.f32 %v169, %v172
    %vm174 = vweird.f32 %v154
    %vm175 = vweird.f32 %v169
    %vm176 = vmor %vm174, %vm175
    %v177 = vsel %vm176, %v169, %v173
    %v178 = vand.u32 2147483647, %v154
    %vm179 = vcmp.eq.f32.partialorder %v178, 8.507059e+37
    %v180 = vand.u32 %v154, 2147483648
    %v181 = vor.u32 1.1754944e-38, %v180
    %v182 = vsel %vm179, %v181, %v177
    %v183 = vmul.f32 %v26, %v168
    %v184 = vmul.f32 %v27, %v182
    %v185 = vrot.slane %v105, 4
    %v187 = vmul.f32 %v183, %v185
    %v188 = vmul.f32 %v184, %v185
    %v189 = vsel %vm31, %v107, %v187
    %v190 = vsel %vm31, %v108, %v188
    %191 = vst [vmem:[#allocation5] sm:$0xff] %v189
    %192 = vst [vmem:[#allocation5 + $0x8] sm:$0xff] %v190
    // Predicated region
    $region14: #{tpu_custom_call.1} parent=1 // pred_check
      _
    $region15: #{tpu_custom_call.1} parent=1 // pred_check_branch
      %194 = sbr.rel (0) target = $region17
    $region16: #{tpu_custom_call.1} parent=1 // pred_region
      %196 = vsyncadd [#allocation4], 0
      %s198 = sshll.u32 [#allocation5], 4
      %s199 = int_to_ptr.vmem [resolvable:$true] %s198
      %s200 = sshll.u32 %s2, 4
      %s201 = int_to_ptr.hbm [resolvable:$true] %s200
      %203 = dma.vmem_to_hbm [thread:$0]  %s199, 256, %s201, [#allocation4]
    $region17: #{tpu_custom_call.1} parent=1 // pred_fallthru
      _
    // Predicated region
    $region18: #{tpu_custom_call.1} parent=1 // pred_check
      _
    $region19: #{tpu_custom_call.1} parent=1 // pred_check_branch
      %205 = sbr.rel (0) target = $region21
    $region20: #{tpu_custom_call.1} parent=1 // pred_region
      %207 = dma.done [#allocation4], 256
    $region21: #{tpu_custom_call.1} parent=1 // pred_fallthru
      _
    %208 = vsyncpa [#allocation3], 1
    %209 = vsyncpa [#allocation4], 1

</llo_original>
